<compile_context>
chip_gen: v5e
topology: v5e:2x2
jax: 0.10.0
libtpu: 0.0.40
codegen_flags: <defaults>
</compile_context>

<pallas_src>
import functools

import jax
import jax.numpy as jnp
from jax.experimental import pallas as pl
from jax.experimental.pallas import tpu as pltpu

LANE = 128  # internal (VMEM/MXU) feature padding; layer widths must be <= 128


def _round_up(x, m):
    return ((x + m - 1) // m) * m


def _mlp_kernel(num_layers, in_dim, out_dim, bf16_activations,
                y_ref, w_ref, b_ref, out_ref, h_pad_ref):
    """Whole MLP (matmuls + bias + tanh) fused; one batch tile per grid step.

    y_ref:     (tm, in_dim)        f32 raw activations (unpadded lanes)
    w_ref:     (L, 128, 128)       f32 or bf16 packed, zero-padded weights
    b_ref:     (L, 1, 128)         f32 packed, zero-padded biases
    out_ref:   (tm, out_dim)       f32 output
    h_pad_ref: (tm, 128)           f32 VMEM scratch (lane-padded activations)
    """
    # Zero-pad the input to 128 lanes inside VMEM.  Padding is exact: padded
    # weight rows/cols and bias lanes are 0 and tanh(0) = 0, so padded lanes
    # stay 0 through every layer.
    h_pad_ref[...] = jnp.zeros_like(h_pad_ref)
    h_pad_ref[:, :in_dim] = y_ref[...].astype(jnp.float32)
    h = h_pad_ref[...]                               # (tm, 128) f32

    mxu_dtype = w_ref.dtype                          # f32, or bf16 (pre-cast)
    use_bf16_acts = bf16_activations and (mxu_dtype == jnp.bfloat16)

    for i in range(num_layers):                      # depth is small: unroll
        z = jnp.dot(h.astype(mxu_dtype), w_ref[i],
                    preferred_element_type=jnp.float32)   # MXU, f32 accumulate
        z = z + b_ref[i]                             # f32 bias add (VPU)
        if i < num_layers - 1:
            if use_bf16_acts:
                # bf16 tanh + bf16 feed into next matmul (v6e/v7x fast path).
                h = jnp.tanh(z.astype(jnp.bfloat16))
            else:
                h = jnp.tanh(z)                      # f32 EUP
        else:
            h = z                                    # final Linear: no tanh, f32

    out_ref[...] = h[:, :out_dim].astype(out_ref.dtype)


def pack_params(weights, biases, matmul_dtype=jnp.float32):
    """Pack per-layer (in_i, out_i) weights / (1, out_i) biases into zero-padded
    (L, 128, 128) and (L, 1, 128) stacks.  Weights are stored in `matmul_dtype`
    (pass jnp.bfloat16 to pre-cast once for the bf16 MXU path); biases stay f32.
    All layer widths must be <= 128."""
    num_layers = len(weights)
    w_packed = jnp.zeros((num_layers, LANE, LANE), jnp.float32)
    b_packed = jnp.zeros((num_layers, 1, LANE), jnp.float32)
    for i, (w, b) in enumerate(zip(weights, biases)):
        fi, fo = w.shape
        assert fi <= LANE and fo <= LANE, "layer width must be <= 128"
        w_packed = w_packed.at[i, :fi, :fo].set(w.astype(jnp.float32))
        b_packed = b_packed.at[i, 0, :fo].set(
            jnp.reshape(b, (-1,)).astype(jnp.float32)
        )
    return w_packed.astype(matmul_dtype), b_packed


def neural_ode_forward(t, y, w_packed, b_packed, out_dim, *,
                       tile_m=1024, bf16_activations=False):
    """Equivalent of neuralODE.forward(t, y); `t` is unused (as in PyTorch).

    y: (batch, in_dim).  Multiple ODE RHS evaluations (RK stages / many
    trajectories) can be fused into one launch by stacking along the batch
    axis before calling; weights stay VMEM-resident across all batch tiles.
    The MXU dtype is taken from w_packed.dtype (f32 or pre-cast bf16).
    """
    del t
    batch, in_dim = y.shape
    num_layers = w_packed.shape[0]
    use_bf16 = (w_packed.dtype == jnp.bfloat16)

    # Batch tile: large (VMEM/HBM friendly), sublane-dense (16 for bf16 vreg
    # packing), and guaranteeing >= 2 grid steps when the batch allows so the
    # "parallel" grid axis can shard across v7x's two TensorCores.
    gran = 16 if use_bf16 else 8
    rows = _round_up(batch, gran)
    if rows >= 2 * gran:
        tm = min(_round_up(tile_m, gran), _round_up(pl.cdiv(rows, 2), gran))
    else:
        tm = gran
    grid = (pl.cdiv(batch, tm),)   # partial last block is masked by Pallas

    # VMEM budget: double-buffered in/out tiles + scratch + resident params.
    act_bytes = tm * LANE * 4
    w_bytes = int(w_packed.size) * w_packed.dtype.itemsize
    b_bytes = int(b_packed.size) * b_packed.dtype.itemsize
    vmem_limit = int(6 * act_bytes + 2 * (w_bytes + b_bytes) + (4 << 20))
    vmem_limit = min(max(vmem_limit, 16 << 20), 64 << 20)

    cost = pl.CostEstimate(
        flops=2 * num_layers * batch * LANE * LANE,
        transcendentals=(num_layers - 1) * batch * LANE,
        bytes_accessed=int(batch * (in_dim + out_dim) * 4 + w_bytes + b_bytes),
    )

    kernel = functools.partial(
        _mlp_kernel, num_layers, in_dim, out_dim, bf16_activations
    )

    out = pl.pallas_call(
        kernel,
        out_shape=jax.ShapeDtypeStruct((batch, out_dim), jnp.float32),
        grid=grid,
        in_specs=[
            # unpadded activations, batch-tiled (last dim == full feature dim)
            pl.BlockSpec((tm, in_dim), lambda i: (i, 0)),
            # packed weights/biases: constant block index -> VMEM-resident
            pl.BlockSpec((num_layers, LANE, LANE), lambda i: (0, 0, 0)),
            pl.BlockSpec((num_layers, 1, LANE), lambda i: (0, 0, 0)),
        ],
        out_specs=pl.BlockSpec((tm, out_dim), lambda i: (i, 0)),
        scratch_shapes=[pltpu.VMEM((tm, LANE), jnp.float32)],
        compiler_params=pltpu.CompilerParams(
            dimension_semantics=("parallel",),
            vmem_limit_bytes=vmem_limit,
        ),
        cost_estimate=cost,
    )(y.astype(jnp.float32), w_packed, b_packed)

    return out.astype(y.dtype)


def init_params(key, structure):
    """Deterministic parameter init matching the PyTorch module's shapes.

    Weight ~ N(0, 0.5) (module's __init__ override);
    bias   ~ U(-1/sqrt(fan_in), 1/sqrt(fan_in)) (PyTorch Linear default).
    Weights are returned already transposed to (in, out)."""
    input_dim, output_dim, hidden_sizes = structure
    dims = [input_dim] + list(hidden_sizes) + [output_dim]
    weights, biases = [], []
    for i in range(len(dims) - 1):
        fan_in, fan_out = dims[i], dims[i + 1]
        key, kw, kb = jax.random.split(key, 3)
        w = jax.random.normal(kw, (fan_in, fan_out), jnp.float32) * 0.5
        bound = 1.0 / jnp.sqrt(jnp.float32(fan_in))
        b = jax.random.uniform(
            kb, (1, fan_out), jnp.float32, minval=-bound, maxval=bound
        )
        weights.append(w)
        biases.append(b)
    return weights, biases


def _reference_forward(y, weights, biases, use_bf16_matmul=False):
    h = y.astype(jnp.float32)
    n = len(weights)
    for i, (w, b) in enumerate(zip(weights, biases)):
        if use_bf16_matmul:
            z = jnp.dot(
                h.astype(jnp.bfloat16),
                w.astype(jnp.bfloat16),
                preferred_element_type=jnp.float32,
            ) + b.astype(jnp.float32)
        else:
            z = jnp.dot(h, w, preferred_element_type=jnp.float32) + b
        h = jnp.tanh(z) if i < n - 1 else z
    return h


if __name__ == "__main__":
    # Glycolysis-style structure: 7 species -> 7 derivatives, 3 hidden layers.
    structure = (7, 7, (32, 32, 32))
    batch = 16

    key = jax.random.PRNGKey(0)
    key, ky = jax.random.split(key)
    y = jax.random.normal(ky, (batch, structure[0]), jnp.float32)
    t = jnp.float32(0.0)  # unused, kept for API parity with forward(t, y)

    weights, biases = init_params(key, structure)

    # f32 MXU path.
    w_f32, b_f32 = pack_params(weights, biases)
    out = neural_ode_forward(t, y, w_f32, b_f32, structure[1])
    out = jax.block_until_ready(out)
    ref = _reference_forward(y, weights, biases)
    assert out.shape == (batch, structure[1])
    assert jnp.allclose(out, ref, atol=1e-4, rtol=1e-4)

    # bf16-operand / f32-accumulate MXU path (weights pre-cast once).
    # Tight check vs a reference applying the same bf16 casts; loose check vs
    # the f32 model (bf16 rel err ~2^-8 on O(1) activations).
    w_bf16, _ = pack_params(weights, biases, matmul_dtype=jnp.bfloat16)
    out_bf16 = neural_ode_forward(t, y, w_bf16, b_f32, structure[1])
    out_bf16 = jax.block_until_ready(out_bf16)
    ref_bf16 = _reference_forward(y, weights, biases, use_bf16_matmul=True)
    assert jnp.allclose(out_bf16, ref_bf16, atol=2e-3, rtol=2e-3)
    assert jnp.allclose(out_bf16, ref, atol=2e-1, rtol=1e-1)

    print("KERNEL_OK")
</pallas_src>

<mosaic_0001>
module attributes {stable_mosaic.version = 11 : i64} {
  func.func @_mlp_kernel(%arg0: i32, %arg1: memref<8x7xf32, #tpu.memory_space<vmem>>, %arg2: memref<4x128x128xf32, #tpu.memory_space<vmem>>, %arg3: memref<4x1x128xf32, #tpu.memory_space<vmem>>, %arg4: memref<8x7xf32, #tpu.memory_space<vmem>>, %arg5: memref<8x128xf32, #tpu.memory_space<vmem>>) attributes {dimension_semantics = [#tpu.dimension_semantics<parallel>], iteration_bounds = array<i64: 2>, scalar_prefetch = 0 : i64, scratch_operands = 1 : i64, tpu.core_type = #tpu.core_type<tc>, window_params = [{transform_indices = @transform_0, window_bounds = array<i64: 8, 7>}, {pipeline_mode = #tpu.pipeline_mode<synchronous>, transform_indices = @transform_1, window_bounds = array<i64: 4, 128, 128>}, {pipeline_mode = #tpu.pipeline_mode<synchronous>, transform_indices = @transform_2, window_bounds = array<i64: 4, 1, 128>}, {transform_indices = @transform_3, window_bounds = array<i64: 8, 7>}]} {
    %cst = arith.constant 0.000000e+00 : f32
    %0 = vector.broadcast %cst : f32 to vector<8x128xf32>
    %c0 = arith.constant 0 : index
    %c0_0 = arith.constant 0 : index
    %1 = vector.load %arg5[%c0, %c0_0] : memref<8x128xf32, #tpu.memory_space<vmem>>, vector<8x128xf32>
    tpu.vector_store %arg5[%c0, %c0_0], %0 {strides = array<i32>} : memref<8x128xf32, #tpu.memory_space<vmem>>, vector<8x128xf32>,
    %c0_1 = arith.constant 0 : index
    %c0_2 = arith.constant 0 : index
    %2 = vector.load %arg1[%c0_1, %c0_2] : memref<8x7xf32, #tpu.memory_space<vmem>>, vector<8x7xf32>
    %c0_3 = arith.constant 0 : index
    %c0_4 = arith.constant 0 : index
    %3 = vector.load %arg5[%c0_3, %c0_4] : memref<8x128xf32, #tpu.memory_space<vmem>>, vector<8x7xf32>
    tpu.vector_store %arg5[%c0_3, %c0_4], %2 {strides = array<i32>} : memref<8x128xf32, #tpu.memory_space<vmem>>, vector<8x7xf32>,
    %c0_5 = arith.constant 0 : index
    %c0_6 = arith.constant 0 : index
    %4 = vector.load %arg5[%c0_5, %c0_6] : memref<8x128xf32, #tpu.memory_space<vmem>>, vector<8x128xf32>
    %c0_7 = arith.constant 0 : index
    %c0_8 = arith.constant 0 : index
    %c0_9 = arith.constant 0 : index
    %5 = vector.load %arg2[%c0_7, %c0_8, %c0_9] : memref<4x128x128xf32, #tpu.memory_space<vmem>>, vector<1x128x128xf32>
    %6 = vector.shape_cast %5 : vector<1x128x128xf32> to vector<128x128xf32>
    %cst_10 = arith.constant dense<0.000000e+00> : vector<8x128xf32>
    %7 = tpu.matmul %4, %6, %cst_10 {dimension_numbers = #tpu.dot_dimension_numbers<[1], [0], [0], [1], [0, 0, 1, 1], [], []>} : vector<8x128xf32>, vector<128x128xf32>, vector<8x128xf32> -> vector<8x128xf32>
    %c0_11 = arith.constant 0 : index
    %c0_12 = arith.constant 0 : index
    %c0_13 = arith.constant 0 : index
    %8 = vector.load %arg3[%c0_11, %c0_12, %c0_13] : memref<4x1x128xf32, #tpu.memory_space<vmem>>, vector<1x1x128xf32>
    %9 = vector.shape_cast %8 : vector<1x1x128xf32> to vector<1x128xf32>
    %10 = vector.broadcast %9 : vector<1x128xf32> to vector<8x128xf32>
    %11 = arith.addf %7, %10 : vector<8x128xf32>
    %12 = math.tanh %11 : vector<8x128xf32>
    %c1 = arith.constant 1 : index
    %c0_14 = arith.constant 0 : index
    %c0_15 = arith.constant 0 : index
    %13 = vector.load %arg2[%c1, %c0_14, %c0_15] : memref<4x128x128xf32, #tpu.memory_space<vmem>>, vector<1x128x128xf32>
    %14 = vector.shape_cast %13 : vector<1x128x128xf32> to vector<128x128xf32>
    %cst_16 = arith.constant dense<0.000000e+00> : vector<8x128xf32>
    %15 = tpu.matmul %12, %14, %cst_16 {dimension_numbers = #tpu.dot_dimension_numbers<[1], [0], [0], [1], [0, 0, 1, 1], [], []>} : vector<8x128xf32>, vector<128x128xf32>, vector<8x128xf32> -> vector<8x128xf32>
    %c1_17 = arith.constant 1 : index
    %c0_18 = arith.constant 0 : index
    %c0_19 = arith.constant 0 : index
    %16 = vector.load %arg3[%c1_17, %c0_18, %c0_19] : memref<4x1x128xf32, #tpu.memory_space<vmem>>, vector<1x1x128xf32>
    %17 = vector.shape_cast %16 : vector<1x1x128xf32> to vector<1x128xf32>
    %18 = vector.broadcast %17 : vector<1x128xf32> to vector<8x128xf32>
    %19 = arith.addf %15, %18 : vector<8x128xf32>
    %20 = math.tanh %19 : vector<8x128xf32>
    %c2 = arith.constant 2 : index
    %c0_20 = arith.constant 0 : index
    %c0_21 = arith.constant 0 : index
    %21 = vector.load %arg2[%c2, %c0_20, %c0_21] : memref<4x128x128xf32, #tpu.memory_space<vmem>>, vector<1x128x128xf32>
    %22 = vector.shape_cast %21 : vector<1x128x128xf32> to vector<128x128xf32>
    %cst_22 = arith.constant dense<0.000000e+00> : vector<8x128xf32>
    %23 = tpu.matmul %20, %22, %cst_22 {dimension_numbers = #tpu.dot_dimension_numbers<[1], [0], [0], [1], [0, 0, 1, 1], [], []>} : vector<8x128xf32>, vector<128x128xf32>, vector<8x128xf32> -> vector<8x128xf32>
    %c2_23 = arith.constant 2 : index
    %c0_24 = arith.constant 0 : index
    %c0_25 = arith.constant 0 : index
    %24 = vector.load %arg3[%c2_23, %c0_24, %c0_25] : memref<4x1x128xf32, #tpu.memory_space<vmem>>, vector<1x1x128xf32>
    %25 = vector.shape_cast %24 : vector<1x1x128xf32> to vector<1x128xf32>
    %26 = vector.broadcast %25 : vector<1x128xf32> to vector<8x128xf32>
    %27 = arith.addf %23, %26 : vector<8x128xf32>
    %28 = math.tanh %27 : vector<8x128xf32>
    %c3 = arith.constant 3 : index
    %c0_26 = arith.constant 0 : index
    %c0_27 = arith.constant 0 : index
    %29 = vector.load %arg2[%c3, %c0_26, %c0_27] : memref<4x128x128xf32, #tpu.memory_space<vmem>>, vector<1x128x128xf32>
    %30 = vector.shape_cast %29 : vector<1x128x128xf32> to vector<128x128xf32>
    %cst_28 = arith.constant dense<0.000000e+00> : vector<8x128xf32>
    %31 = tpu.matmul %28, %30, %cst_28 {dimension_numbers = #tpu.dot_dimension_numbers<[1], [0], [0], [1], [0, 0, 1, 1], [], []>} : vector<8x128xf32>, vector<128x128xf32>, vector<8x128xf32> -> vector<8x128xf32>
    %c3_29 = arith.constant 3 : index
    %c0_30 = arith.constant 0 : index
    %c0_31 = arith.constant 0 : index
    %32 = vector.load %arg3[%c3_29, %c0_30, %c0_31] : memref<4x1x128xf32, #tpu.memory_space<vmem>>, vector<1x1x128xf32>
    %33 = vector.shape_cast %32 : vector<1x1x128xf32> to vector<1x128xf32>
    %34 = vector.broadcast %33 : vector<1x128xf32> to vector<8x128xf32>
    %35 = arith.addf %31, %34 : vector<8x128xf32>
    %36 = vector.extract_strided_slice %35 {offsets = [0, 0], sizes = [8, 7], strides = [1, 1]} : vector<8x128xf32> to vector<8x7xf32>
    %c0_32 = arith.constant 0 : index
    %c0_33 = arith.constant 0 : index
    %37 = vector.load %arg4[%c0_32, %c0_33] : memref<8x7xf32, #tpu.memory_space<vmem>>, vector<8x7xf32>
    tpu.vector_store %arg4[%c0_32, %c0_33], %36 {strides = array<i32>} : memref<8x7xf32, #tpu.memory_space<vmem>>, vector<8x7xf32>,
    return
  }
  func.func @transform_0(%arg0: i32) -> (i32, i32) {
    %c0_i32 = arith.constant 0 : i32
    %c0_i32_0 = arith.constant 0 : i32
    return %arg0, %c0_i32 : i32, i32
  }
  func.func @transform_1(%arg0: i32) -> (i32, i32, i32) {
    %c0_i32 = arith.constant 0 : i32
    %c0_i32_0 = arith.constant 0 : i32
    %c0_i32_1 = arith.constant 0 : i32
    %c0_i32_2 = arith.constant 0 : i32
    return %c0_i32, %c0_i32_0, %c0_i32_1 : i32, i32, i32
  }
  func.func @transform_2(%arg0: i32) -> (i32, i32, i32) {
    %c0_i32 = arith.constant 0 : i32
    %c0_i32_0 = arith.constant 0 : i32
    %c0_i32_1 = arith.constant 0 : i32
    %c0_i32_2 = arith.constant 0 : i32
    return %c0_i32, %c0_i32_0, %c0_i32_1 : i32, i32, i32
  }
  func.func @transform_3(%arg0: i32) -> (i32, i32) {
    %c0_i32 = arith.constant 0 : i32
    %c0_i32_0 = arith.constant 0 : i32
    return %arg0, %c0_i32 : i32, i32
  }
}

</mosaic_0001>

<llo_original>
// kernel: tpu_custom_call.1
$region0: #{tpu_custom_call.1}
  #allocation0 [shape = 'u32[]', space=smem, size = 0x4, offset = 0x4, fixed_abs, tag = 'smem constant byte address 0x4 - core index']
  #allocation1 [shape = 'u32[72,128]{1,0:T(1,128)}', space=vmem, size = 0x9000, scoped, tag = 'internal scratch']
  #allocation2 [shape = 'f32[8,128]{1,0:T(8,128)}', space=vmem, size = 0x1000, scoped, tag = 'scratch operand']
  %s0 = inlined_call_operand.vmem [shape: f32[16,7], index: 0, kind: input, shape index: {}]
  %s1 = inlined_call_operand.hbm [shape: f32[4,128,128], index: 1, kind: input, shape index: {}]
  %s2 = inlined_call_operand.vmem [shape: f32[4,1,128], index: 2, kind: input, shape index: {}]
  %s3 = inlined_call_operand.vmem [shape: f32[16,7], index: 3, kind: output, shape index: {}]
  %s4 = sld [smem:[#allocation0]]
  $region49: #{tpu_custom_call.1} parent=0
    _
  %s6 = ssub.s32 1, %s4
  %s7 = scalar_select 0, %s6, %s4
  $region1: #{tpu_custom_call.1} parent=0
    #allocation3 [shape = 'u8[262144]{0}', space=vmem, size = 0x40000, scoped, tag = 'input window, operand 1, single buffered']
    #allocation4 [shape = 's32[2]{0}', space=sflag, size = 0x8, scoped, tag = 'scoped memory for tpu_custom_call.1']
    %8 = vsyncpa [#allocation4], 0
    loop: start=0, step=1, limit=4
    $region2: #{tpu_custom_call.1} parent=1 // loop_pre_header
      _
    $region3: #{tpu_custom_call.1} parent=1 // loop_header
      %s10 = sphi 0, %s14
      %p11 = scmp.ge.s32.totalorder %s10, 4
      %s20 = sphi 0, %s22
      %s23 = sphi 0, %s20
      %s24 = sphi 0, %s23
      %s40 = sphi 0, %s24
      %s44 = sphi 0, %s44
      %s46 = sphi 0, %s44
      %s47 = sphi 0, %s46
      %s61 = sphi 0, %s47
      %s65 = sphi 0, %s65
      %s67 = sphi 0, %s65
      %s68 = sphi 0, %s67
      %s82 = sphi 0, %s68
      %s88 = sphi 0, %s90
      %s91 = sphi 0, %s88
      %s92 = sphi 0, %s91
      %s108 = sphi 0, %s92
    $region4: #{tpu_custom_call.1} parent=1 // loop_header_branch
      %13 = sbr.rel (%p11) target = $region8
    $region5: #{tpu_custom_call.1} parent=1 // loop_body
      %s15 = ssub.s32 %s10, 1
      %s16 = ssub.s32 %s10, 2
      %s17 = sadd.s32 %s10, 1
      %s18 = ssub.s32 %s10, %s17
      %p19 = scmp.eq.s32.totalorder %s18, 0
      %s21 = sadd.s32 %s20, 1
      %s22 = scalar_select %p19, %s20, %s21
      %p25 = pneg %p19
      %p26 = scmp.eq.s32.totalorder %s10, 1
      %p27 = por %p25, %p26
      %p28 = scmp.ne.s32.totalorder %s20, %s23
      %p29 = scmp.eq.s32.totalorder %s10, 0
      %p30 = por %p28, %p29
      %p31 = scmp.ne.s32.totalorder %s20, %s23
      %p32 = scmp.eq.s32.totalorder %s15, 1
      %p33 = por %p31, %p32
      %p34 = scmp.ne.s32.totalorder %s23, %s24
      %p35 = scmp.eq.s32.totalorder %s15, 0
      %p36 = por %p34, %p35
      %p37 = scmp.ne.s32.totalorder %s23, %s24
      %p38 = scmp.eq.s32.totalorder %s16, 1
      %p39 = por %p37, %p38
      %p41 = scmp.ne.s32.totalorder %s24, %s40
      %p42 = scmp.eq.s32.totalorder %s16, 0
      %p43 = por %p41, %p42
      %s45 = sadd.s32 %s44, 1
      %p48 = scmp.eq.s32.totalorder %s10, 1
      %p49 = scmp.ne.s32.totalorder %s44, %s46
      %p50 = scmp.eq.s32.totalorder %s10, 0
      %p51 = por %p49, %p50
      %p52 = scmp.ne.s32.totalorder %s44, %s46
      %p53 = scmp.eq.s32.totalorder %s15, 1
      %p54 = por %p52, %p53
      %p55 = scmp.ne.s32.totalorder %s46, %s47
      %p56 = scmp.eq.s32.totalorder %s15, 0
      %p57 = por %p55, %p56
      %p58 = scmp.ne.s32.totalorder %s46, %s47
      %p59 = scmp.eq.s32.totalorder %s16, 1
      %p60 = por %p58, %p59
      %p62 = scmp.ne.s32.totalorder %s47, %s61
      %p63 = scmp.eq.s32.totalorder %s16, 0
      %p64 = por %p62, %p63
      %s66 = sadd.s32 %s65, 1
      %p69 = scmp.eq.s32.totalorder %s10, 1
      %p70 = scmp.ne.s32.totalorder %s65, %s67
      %p71 = scmp.eq.s32.totalorder %s10, 0
      %p72 = por %p70, %p71
      %p73 = scmp.ne.s32.totalorder %s65, %s67
      %p74 = scmp.eq.s32.totalorder %s15, 1
      %p75 = por %p73, %p74
      %p76 = scmp.ne.s32.totalorder %s67, %s68
      %p77 = scmp.eq.s32.totalorder %s15, 0
      %p78 = por %p76, %p77
      %p79 = scmp.ne.s32.totalorder %s67, %s68
      %p80 = scmp.eq.s32.totalorder %s16, 1
      %p81 = por %p79, %p80
      %p83 = scmp.ne.s32.totalorder %s68, %s82
      %p84 = scmp.eq.s32.totalorder %s16, 0
      %p85 = por %p83, %p84
      %s86 = ssub.s32 %s10, %s17
      %p87 = scmp.eq.s32.totalorder %s86, 0
      %s89 = sadd.s32 %s88, 1
      %s90 = scalar_select %p87, %s88, %s89
      %p93 = pneg %p87
      %p94 = scmp.eq.s32.totalorder %s10, 1
      %p95 = por %p93, %p94
      %p96 = scmp.ne.s32.totalorder %s88, %s91
      %p97 = scmp.eq.s32.totalorder %s10, 0
      %p98 = por %p96, %p97
      %p99 = scmp.ne.s32.totalorder %s88, %s91
      %p100 = scmp.eq.s32.totalorder %s15, 1
      %p101 = por %p99, %p100
      %p102 = scmp.ne.s32.totalorder %s91, %s92
      %p103 = scmp.eq.s32.totalorder %s15, 0
      %p104 = por %p102, %p103
      %p105 = scmp.ne.s32.totalorder %s91, %s92
      %p106 = scmp.eq.s32.totalorder %s16, 1
      %p107 = por %p105, %p106
      %p109 = scmp.ne.s32.totalorder %s92, %s108
      %p110 = scmp.eq.s32.totalorder %s16, 0
      %p111 = por %p109, %p110
      %p112 = scmp.le.s32.totalorder 1, %s10
      %p113 = scmp.lt.s32.totalorder %s10, 3
      %p114 = pnand %p112, %p113
      %p115 = pneg %p114
      // Predicated region
      $region9: #{tpu_custom_call.1} parent=5 // pred_check
        _
      $region10: #{tpu_custom_call.1} parent=5 // pred_check_branch
        %117 = sbr.rel (%p114) target = $region12
      $region11: #{tpu_custom_call.1} parent=5 // pred_region
        %s118 = ssub.s32 %s10, 1
        // Predicated region
        $region13: #{tpu_custom_call.1} parent=11 // pred_check
          %p119 = pneg %p57
        $region14: #{tpu_custom_call.1} parent=11 // pred_check_branch
          %121 = sbr.rel (%p119) target = $region16
        $region15: #{tpu_custom_call.1} parent=11 // pred_region
          %123 = vsyncadd [#allocation4], 0
          %s124 = sshll.u32 %s1, 4
          %s125 = int_to_ptr.hbm [resolvable:$true] %s124
          %s126 = sshll.u32 [#allocation3], 4
          %s127 = int_to_ptr.vmem [resolvable:$true] %s126
          %132 = dma.hbm_to_vmem [thread:$0]  %s125, 8192, %s127, [#allocation4], 128, 128, 8
        $region16: #{tpu_custom_call.1} parent=11 // pred_fallthru
          _
        // Predicated region
        $region17: #{tpu_custom_call.1} parent=11 // pred_check
          %p133 = pneg %p78
        $region18: #{tpu_custom_call.1} parent=11 // pred_check_branch
          %135 = sbr.rel (%p133) target = $region20
        $region19: #{tpu_custom_call.1} parent=11 // pred_region
          _
        $region20: #{tpu_custom_call.1} parent=11 // pred_fallthru
          _
      $region12: #{tpu_custom_call.1} parent=5 // pred_fallthru
        _
      %p136 = scmp.lt.s32.totalorder %s10, 2
      // Predicated region
      $region21: #{tpu_custom_call.1} parent=5 // pred_check
        %p137 = pneg %p136
      $region22: #{tpu_custom_call.1} parent=5 // pred_check_branch
        %139 = sbr.rel (%p137) target = $region24
      $region23: #{tpu_custom_call.1} parent=5 // pred_region
        // Predicated region
        $region25: #{tpu_custom_call.1} parent=23 // pred_check
          %p140 = pneg %p30
        $region26: #{tpu_custom_call.1} parent=23 // pred_check_branch
          %142 = sbr.rel (%p140) target = $region28
        $region27: #{tpu_custom_call.1} parent=23 // pred_region
          %p143 = scmp.lt.s32.totalorder %s10, 1
          %s144 = scalar_select %p143, %s10, 1
          %s145 = smul.addr %s144, 8
          %s146 = scalar_lea.vmem %s0, %s145
        $region28: #{tpu_custom_call.1} parent=23 // pred_fallthru
          _
      $region24: #{tpu_custom_call.1} parent=5 // pred_fallthru
        _
      %p147 = scmp.le.s32.totalorder 1, %s10
      %p148 = scmp.lt.s32.totalorder %s10, 3
      %p149 = pnand %p147, %p148
      %p150 = pneg %p149
      // Predicated region
      $region29: #{tpu_custom_call.1} parent=5 // pred_check
        _
      $region30: #{tpu_custom_call.1} parent=5 // pred_check_branch
        %152 = sbr.rel (%p149) target = $region32
      $region31: #{tpu_custom_call.1} parent=5 // pred_region
        %s153 = ssub.s32 %s10, 1
        // Predicated region
        $region33: #{tpu_custom_call.1} parent=31 // pred_check
          %p154 = pneg %p57
        $region34: #{tpu_custom_call.1} parent=31 // pred_check_branch
          %156 = sbr.rel (%p154) target = $region36
        $region35: #{tpu_custom_call.1} parent=31 // pred_region
          %158 = dma.done [#allocation4], 8192
        $region36: #{tpu_custom_call.1} parent=31 // pred_fallthru
          _
        %p159 = scmp.lt.s32.totalorder %s15, 1
        %s160 = scalar_select %p159, %s15, 1
        %s161 = smul.addr %s160, 8
        %s162 = scalar_lea.vmem %s0, %s161
        %p163 = pneg %p36
        %p164 = pneg %p33
        %p165 = pneg %p57
        %p166 = pneg %p54
        %p167 = pneg %p78
        %p168 = pneg %p75
        %p169 = pneg %p104
        %p170 = pneg %p101
        %p171 = scmp.lt.s32.totalorder %s15, 1
        %s172 = scalar_select %p171, %s15, 1
        %s173 = smul.addr %s172, 8
        %s174 = scalar_lea.vmem %s3, %s173
        %p175 = scmp.lt.s32.totalorder %s15, 1
        %s176 = scalar_select %p175, %s15, 1
        %s177 = smul.addr %s176, 8
        %s178 = scalar_lea.vmem %s0, %s177
        %p179 = scmp.lt.s32.totalorder %s15, 1
        %s180 = scalar_select %p179, %s15, 1
        %s181 = smul.addr %s180, 8
        %s182 = scalar_lea.vmem %s3, %s181
        %183 = vst [vmem:[#allocation2] sm:$0xff] 0.0
        %v184 = vld [vmem:[%s178] sm:$0xff]
        %vm185 = vcmask 56320
        %186 = vst.msk [vmem:[#allocation2] sm:$0xff] %vm185, %v184
        %v187 = vld [vmem:[#allocation2] sm:$0xff]
        %v188 = vld [vmem:[#allocation3] sm:$0xff]
        %v189 = vld [vmem:[#allocation3 + $0x8] sm:$0xff]
        %v190 = vld [vmem:[#allocation3 + $0x10] sm:$0xff]
        %v191 = vld [vmem:[#allocation3 + $0x18] sm:$0xff]
        %v192 = vld [vmem:[#allocation3 + $0x20] sm:$0xff]
        %v193 = vld [vmem:[#allocation3 + $0x28] sm:$0xff]
        %v194 = vld [vmem:[#allocation3 + $0x30] sm:$0xff]
        %v195 = vld [vmem:[#allocation3 + $0x38] sm:$0xff]
        %v196 = vld [vmem:[#allocation3 + $0x40] sm:$0xff]
        %v197 = vld [vmem:[#allocation3 + $0x48] sm:$0xff]
        %v198 = vld [vmem:[#allocation3 + $0x50] sm:$0xff]
        %v199 = vld [vmem:[#allocation3 + $0x58] sm:$0xff]
        %v200 = vld [vmem:[#allocation3 + $0x60] sm:$0xff]
        %v201 = vld [vmem:[#allocation3 + $0x68] sm:$0xff]
        %v202 = vld [vmem:[#allocation3 + $0x70] sm:$0xff]
        %v203 = vld [vmem:[#allocation3 + $0x78] sm:$0xff]
        %v204 = vld [vmem:[%s2] sm:$0x1]
        %v206 = vperm.slane %v204, 0
        %208 = vmatpush.msra.mxu0 %v203
        %209 = vmatpush.msra.mxu0 %v202
        %210 = vmatpush.msra.mxu0 %v201
        %211 = vmatpush.msra.mxu0 %v200
        %212 = vmatpush.msra.mxu0 %v199
        %213 = vmatpush.msra.mxu0 %v198
        %214 = vmatpush.msra.mxu0 %v197
        %215 = vmatpush.msra.mxu0 %v196
        %216 = vmatpush.msra.mxu0 %v195
        %217 = vmatpush.msra.mxu0 %v194
        %218 = vmatpush.msra.mxu0 %v193
        %219 = vmatpush.msra.mxu0 %v192
        %220 = vmatpush.msra.mxu0 %v191
        %221 = vmatpush.msra.mxu0 %v190
        %222 = vmatpush.msra.mxu0 %v189
        %223 = vmatpush.msra.mxu0 %v188
        %224 = vmatmul.f32.gmra.mxu0 %v187
        %v225 = vpop.f32.mrf.mxu0
        %v226 = vadd.f32 %v206, %v225
        %227 = vdwg.mxu0
        %v228 = vtanh.pop %v226
        %s229 = scalar_lea.vmem [#allocation3], 128
        %v230 = vld [vmem:[%s229] sm:$0xff]
        %v231 = vld [vmem:[%s229 + $0x8] sm:$0xff]
        %v232 = vld [vmem:[%s229 + $0x10] sm:$0xff]
        %v233 = vld [vmem:[%s229 + $0x18] sm:$0xff]
        %v234 = vld [vmem:[%s229 + $0x20] sm:$0xff]
        %v235 = vld [vmem:[%s229 + $0x28] sm:$0xff]
        %v236 = vld [vmem:[%s229 + $0x30] sm:$0xff]
        %v237 = vld [vmem:[%s229 + $0x38] sm:$0xff]
        %v238 = vld [vmem:[%s229 + $0x40] sm:$0xff]
        %v239 = vld [vmem:[%s229 + $0x48] sm:$0xff]
        %v240 = vld [vmem:[%s229 + $0x50] sm:$0xff]
        %v241 = vld [vmem:[%s229 + $0x58] sm:$0xff]
        %v242 = vld [vmem:[%s229 + $0x60] sm:$0xff]
        %v243 = vld [vmem:[%s229 + $0x68] sm:$0xff]
        %v244 = vld [vmem:[%s229 + $0x70] sm:$0xff]
        %v245 = vld [vmem:[%s229 + $0x78] sm:$0xff]
        %s246 = scalar_lea.vmem %s2, 1
        %v247 = vld [vmem:[%s246] sm:$0x1]
        %v249 = vperm.slane %v247, 0
        %251 = vmatpush.msra.mxu0 %v245
        %252 = vmatpush.msra.mxu0 %v244
        %253 = vmatpush.msra.mxu0 %v243
        %254 = vmatpush.msra.mxu0 %v242
        %255 = vmatpush.msra.mxu0 %v241
        %256 = vmatpush.msra.mxu0 %v240
        %257 = vmatpush.msra.mxu0 %v239
        %258 = vmatpush.msra.mxu0 %v238
        %259 = vmatpush.msra.mxu0 %v237
        %260 = vmatpush.msra.mxu0 %v236
        %261 = vmatpush.msra.mxu0 %v235
        %262 = vmatpush.msra.mxu0 %v234
        %263 = vmatpush.msra.mxu0 %v233
        %264 = vmatpush.msra.mxu0 %v232
        %265 = vmatpush.msra.mxu0 %v231
        %266 = vmatpush.msra.mxu0 %v230
        %267 = vmatmul.f32.gmra.mxu0 %v228
        %v268 = vpop.f32.mrf.mxu0
        %v269 = vadd.f32 %v249, %v268
        %270 = vdwg.mxu0
        %v271 = vtanh.pop %v269
        %s272 = scalar_lea.vmem [#allocation3], 256
        %v273 = vld [vmem:[%s272] sm:$0xff]
        %v274 = vld [vmem:[%s272 + $0x8] sm:$0xff]
        %v275 = vld [vmem:[%s272 + $0x10] sm:$0xff]
        %v276 = vld [vmem:[%s272 + $0x18] sm:$0xff]
        %v277 = vld [vmem:[%s272 + $0x20] sm:$0xff]
        %v278 = vld [vmem:[%s272 + $0x28] sm:$0xff]
        %v279 = vld [vmem:[%s272 + $0x30] sm:$0xff]
        %v280 = vld [vmem:[%s272 + $0x38] sm:$0xff]
        %v281 = vld [vmem:[%s272 + $0x40] sm:$0xff]
        %v282 = vld [vmem:[%s272 + $0x48] sm:$0xff]
        %v283 = vld [vmem:[%s272 + $0x50] sm:$0xff]
        %v284 = vld [vmem:[%s272 + $0x58] sm:$0xff]
        %v285 = vld [vmem:[%s272 + $0x60] sm:$0xff]
        %v286 = vld [vmem:[%s272 + $0x68] sm:$0xff]
        %v287 = vld [vmem:[%s272 + $0x70] sm:$0xff]
        %v288 = vld [vmem:[%s272 + $0x78] sm:$0xff]
        %s289 = scalar_lea.vmem %s2, 2
        %v290 = vld [vmem:[%s289] sm:$0x1]
        %v292 = vperm.slane %v290, 0
        %294 = vmatpush.msra.mxu0 %v288
        %295 = vmatpush.msra.mxu0 %v287
        %296 = vmatpush.msra.mxu0 %v286
        %297 = vmatpush.msra.mxu0 %v285
        %298 = vmatpush.msra.mxu0 %v284
        %299 = vmatpush.msra.mxu0 %v283
        %300 = vmatpush.msra.mxu0 %v282
        %301 = vmatpush.msra.mxu0 %v281
        %302 = vmatpush.msra.mxu0 %v280
        %303 = vmatpush.msra.mxu0 %v279
        %304 = vmatpush.msra.mxu0 %v278
        %305 = vmatpush.msra.mxu0 %v277
        %306 = vmatpush.msra.mxu0 %v276
        %307 = vmatpush.msra.mxu0 %v275
        %308 = vmatpush.msra.mxu0 %v274
        %309 = vmatpush.msra.mxu0 %v273
        %310 = vmatmul.f32.gmra.mxu0 %v271
        %v311 = vpop.f32.mrf.mxu0
        %v312 = vadd.f32 %v292, %v311
        %313 = vdwg.mxu0
        %v314 = vtanh.pop %v312
        %s315 = scalar_lea.vmem [#allocation3], 384
        %v316 = vld [vmem:[%s315] sm:$0xff]
        %v317 = vld [vmem:[%s315 + $0x8] sm:$0xff]
        %v318 = vld [vmem:[%s315 + $0x10] sm:$0xff]
        %v319 = vld [vmem:[%s315 + $0x18] sm:$0xff]
        %v320 = vld [vmem:[%s315 + $0x20] sm:$0xff]
        %v321 = vld [vmem:[%s315 + $0x28] sm:$0xff]
        %v322 = vld [vmem:[%s315 + $0x30] sm:$0xff]
        %v323 = vld [vmem:[%s315 + $0x38] sm:$0xff]
        %v324 = vld [vmem:[%s315 + $0x40] sm:$0xff]
        %v325 = vld [vmem:[%s315 + $0x48] sm:$0xff]
        %v326 = vld [vmem:[%s315 + $0x50] sm:$0xff]
        %v327 = vld [vmem:[%s315 + $0x58] sm:$0xff]
        %v328 = vld [vmem:[%s315 + $0x60] sm:$0xff]
        %v329 = vld [vmem:[%s315 + $0x68] sm:$0xff]
        %v330 = vld [vmem:[%s315 + $0x70] sm:$0xff]
        %v331 = vld [vmem:[%s315 + $0x78] sm:$0xff]
        %s332 = scalar_lea.vmem %s2, 3
        %v333 = vld [vmem:[%s332] sm:$0x1]
        %v335 = vperm.slane %v333, 0
        %337 = vmatpush.msra.mxu0 %v331
        %338 = vmatpush.msra.mxu0 %v330
        %339 = vmatpush.msra.mxu0 %v329
        %340 = vmatpush.msra.mxu0 %v328
        %341 = vmatpush.msra.mxu0 %v327
        %342 = vmatpush.msra.mxu0 %v326
        %343 = vmatpush.msra.mxu0 %v325
        %344 = vmatpush.msra.mxu0 %v324
        %345 = vmatpush.msra.mxu0 %v323
        %346 = vmatpush.msra.mxu0 %v322
        %347 = vmatpush.msra.mxu0 %v321
        %348 = vmatpush.msra.mxu0 %v320
        %349 = vmatpush.msra.mxu0 %v319
        %350 = vmatpush.msra.mxu0 %v318
        %351 = vmatpush.msra.mxu0 %v317
        %352 = vmatpush.msra.mxu0 %v316
        %353 = vmatmul.f32.gmra.mxu0 %v314
        %v354 = vpop.f32.mrf.mxu0
        %v355 = vadd.f32 %v335, %v354
        %356 = vdwg.mxu0
        %357 = vst.msk [vmem:[%s182] sm:$0xff] %vm185, %v355
        %p358 = scmp.lt.s32.totalorder %s15, 1
        %s359 = scalar_select %p358, %s15, 1
        %s360 = smul.addr %s359, 8
        %s361 = scalar_lea.vmem %s3, %s360
        // Predicated region
        $region37: #{tpu_custom_call.1} parent=31 // pred_check
          %p362 = pneg %p101
        $region38: #{tpu_custom_call.1} parent=31 // pred_check_branch
          %364 = sbr.rel (%p362) target = $region40
        $region39: #{tpu_custom_call.1} parent=31 // pred_region
          _
        $region40: #{tpu_custom_call.1} parent=31 // pred_fallthru
          _
      $region32: #{tpu_custom_call.1} parent=5 // pred_fallthru
        _
      %p365 = scmp.le.s32.totalorder 2, %s10
      // Predicated region
      $region41: #{tpu_custom_call.1} parent=5 // pred_check
        %p366 = pneg %p365
      $region42: #{tpu_custom_call.1} parent=5 // pred_check_branch
        %368 = sbr.rel (%p366) target = $region44
      $region43: #{tpu_custom_call.1} parent=5 // pred_region
        %s369 = ssub.s32 %s10, 2
        // Predicated region
        $region45: #{tpu_custom_call.1} parent=43 // pred_check
          %p370 = pneg %p107
        $region46: #{tpu_custom_call.1} parent=43 // pred_check_branch
          %372 = sbr.rel (%p370) target = $region48
        $region47: #{tpu_custom_call.1} parent=43 // pred_region
          %p373 = scmp.lt.s32.totalorder %s16, 1
          %s374 = scalar_select %p373, %s16, 1
          %s375 = smul.addr %s374, 8
          %s376 = scalar_lea.vmem %s3, %s375
        $region48: #{tpu_custom_call.1} parent=43 // pred_fallthru
          _
      $region44: #{tpu_custom_call.1} parent=5 // pred_fallthru
        _
    $region6: #{tpu_custom_call.1} parent=1 // loop_footer
      %s14 = sadd.s32 1, %s10
    $region7: #{tpu_custom_call.1} parent=1 // loop_footer_branch
      %9 = sbr.rel target = $region3
    $region8: #{tpu_custom_call.1} parent=1 // loop_exit
      _
    %377 = vsyncpa [#allocation4], 1
    %s378 = scalar_lea.sflag [#allocation4], 1
    %379 = vsyncpa %s378, 1

</llo_original>
